<compile_context>
chip_gen: v6e
topology: v6e:2x2x1
jax: 0.10.0
libtpu: 0.0.40
codegen_flags: <defaults>
</compile_context>

<pallas_src>
import jax
import jax.numpy as jnp
from jax.experimental import pallas as pl
from jax.experimental.pallas import tpu as pltpu

LANE = 128


def _round_up(n, m):
    return ((n + m - 1) // m) * m


def mlp_kernel(p_ref, x_ref, o_ref):
    # p_ref: SMEM f32[26] flat parameters
    #   [0:9]   w1 (3,3) torch (out,in) layout, row-major
    #   [9:12]  b1 (3,)
    #   [12:18] w2 (2,3)
    #   [18:20] b2 (2,)
    #   [20:24] w3 (2,2)
    #   [24:26] b3 (2,)
    # x_ref: VMEM (3, TB)   features on sublanes, batch on lanes
    # o_ref: VMEM (2, TB)
    x = x_ref[...]
    x0, x1, x2 = x[0:1, :], x[1:2, :], x[2:3, :]

    def sigmoid(z):
        # 1/(1+exp(-z)); exp on EUP, approx reciprocal on EUP (VALU stays free)
        return pl.reciprocal(1.0 + jnp.exp(-z), approx=True)

    # ---- Linear(3,3) + sigmoid (unrolled VPU FMAs) ----
    h1 = []
    for j in range(3):
        z = (p_ref[3 * j + 0] * x0
             + p_ref[3 * j + 1] * x1
             + p_ref[3 * j + 2] * x2
             + p_ref[9 + j])
        h1.append(sigmoid(z))

    # ---- Linear(3,2) + relu ----
    h2 = []
    for j in range(2):
        base = 12 + 3 * j
        z = (p_ref[base + 0] * h1[0]
             + p_ref[base + 1] * h1[1]
             + p_ref[base + 2] * h1[2]
             + p_ref[18 + j])
        h2.append(jnp.maximum(z, 0.0))

    # ---- Linear(2,2) + 2-class softmax == sigmoid of logit difference ----
    z_out = []
    for j in range(2):
        base = 20 + 2 * j
        z_out.append(p_ref[base + 0] * h2[0]
                     + p_ref[base + 1] * h2[1]
                     + p_ref[24 + j])

    p0 = sigmoid(z_out[0] - z_out[1])
    o_ref[0:1, :] = p0
    o_ref[1:2, :] = 1.0 - p0


def mlp_forward(x, params, *, block_b=16384):
    """x: [B, 3] float32. params: dict of torch-layout weights (out, in) and biases.

    Returns [B, 2] float32 softmax probabilities.
    """
    B = x.shape[0]

    # Lane-dense layout: batch on lanes, padded to a multiple of the lane tile.
    TB = min(block_b, _round_up(B, LANE))      # lane-tile (multiple of 128)
    Bp = _round_up(B, TB)                      # padded batch
    grid = (Bp // TB,)

    xt = jnp.pad(x.astype(jnp.float32).T, ((0, 0), (0, Bp - B)))   # (3, Bp)

    # Flat scalar parameter vector -> SMEM.
    p_flat = jnp.concatenate([
        params["w1"].reshape(-1), params["b1"].reshape(-1),
        params["w2"].reshape(-1), params["b2"].reshape(-1),
        params["w3"].reshape(-1), params["b3"].reshape(-1),
    ]).astype(jnp.float32)                                         # (26,)

    cost = pl.CostEstimate(
        flops=38 * Bp,                 # 2*(3*3 + 3*2 + 2*2) MACs per sample
        transcendentals=4 * Bp,        # 3 sigmoid exps + 1 softmax exp
        bytes_accessed=(3 + 2) * 4 * Bp,
    )

    out = pl.pallas_call(
        mlp_kernel,
        out_shape=jax.ShapeDtypeStruct((2, Bp), jnp.float32),
        grid_spec=pltpu.PrefetchScalarGridSpec(
            num_scalar_prefetch=0,
            grid=grid,
            in_specs=[
                pl.BlockSpec(memory_space=pltpu.MemorySpace.SMEM),   # params
                pl.BlockSpec((3, TB), lambda i: (0, i)),             # x tile
            ],
            out_specs=pl.BlockSpec((2, TB), lambda i: (0, i)),
        ),
        compiler_params=pltpu.CompilerParams(
            dimension_semantics=("parallel",),
        ),
        cost_estimate=cost,
    )(p_flat, xt)

    return out[:, :B].T                                            # (B, 2)


def mlp_reference(x, params):
    """Pure-JAX reference of the PyTorch forward pass."""
    z1 = x @ params["w1"].T + params["b1"]
    h1 = jax.nn.sigmoid(z1)
    z2 = h1 @ params["w2"].T + params["b2"]
    h2 = jnp.maximum(z2, 0.0)
    z3 = h2 @ params["w3"].T + params["b3"]
    return jax.nn.softmax(z3, axis=-1)


def init_params(key):
    """Deterministic init matching the PyTorch module's shapes/init schemes."""
    k1, k2, k3, kb1, kb2, kb3 = jax.random.split(key, 6)

    # linear1: Linear(3, 3), xavier_normal_ weight, default uniform bias
    std1 = (2.0 / (3 + 3)) ** 0.5
    w1 = std1 * jax.random.normal(k1, (3, 3), jnp.float32)             # (out, in)
    b1 = jax.random.uniform(kb1, (3,), jnp.float32, -1.0 / 3**0.5, 1.0 / 3**0.5)

    # linear2: Linear(3, 2), kaiming_normal_ weight (fan_in=3), default uniform bias
    std2 = (2.0 / 3) ** 0.5
    w2 = std2 * jax.random.normal(k2, (2, 3), jnp.float32)             # (out, in)
    b2 = jax.random.uniform(kb2, (2,), jnp.float32, -1.0 / 3**0.5, 1.0 / 3**0.5)

    # out: Linear(2, 2), default PyTorch init (uniform +/- 1/sqrt(fan_in=2))
    bound3 = 1.0 / 2**0.5
    w3 = jax.random.uniform(k3, (2, 2), jnp.float32, -bound3, bound3)  # (out, in)
    b3 = jax.random.uniform(kb3, (2,), jnp.float32, -bound3, bound3)

    return {"w1": w1, "b1": b1, "w2": w2, "b2": b2, "w3": w3, "b3": b3}


if __name__ == "__main__":
    key = jax.random.PRNGKey(0)
    kx, kp = jax.random.split(key)

    B = 16
    x = jax.random.normal(kx, (B, 3), jnp.float32)
    params = init_params(kp)

    out = mlp_forward(x, params)
    out = jax.block_until_ready(out)

    # Correctness checks vs pure-JAX reference (approx reciprocal -> loose tol).
    ref = mlp_reference(x, params)
    assert out.shape == (B, 2)
    assert jnp.allclose(jnp.sum(out, axis=-1), 1.0, atol=1e-5)
    assert jnp.allclose(out, ref, atol=5e-3, rtol=5e-3)

    print("KERNEL_OK")
</pallas_src>

<mosaic_0001>
module attributes {stable_mosaic.version = 11 : i64} {
  func.func @mlp_kernel(%arg0: i32, %arg1: memref<26xf32, #tpu.memory_space<smem>>, %arg2: memref<3x128xf32, #tpu.memory_space<vmem>>, %arg3: memref<2x128xf32, #tpu.memory_space<vmem>>) attributes {dimension_semantics = [#tpu.dimension_semantics<parallel>], iteration_bounds = array<i64: 1>, scalar_prefetch = 0 : i64, scratch_operands = 0 : i64, tpu.core_type = #tpu.core_type<tc>, window_params = [{transform_indices = @transform_0, window_bounds = array<i64: 26>}, {transform_indices = @transform_1, window_bounds = array<i64: 3, 128>}, {transform_indices = @transform_2, window_bounds = array<i64: 2, 128>}]} {
    %c0 = arith.constant 0 : index
    %c0_0 = arith.constant 0 : index
    %0 = vector.load %arg2[%c0, %c0_0] : memref<3x128xf32, #tpu.memory_space<vmem>>, vector<3x128xf32>
    %1 = vector.extract_strided_slice %0 {offsets = [0, 0], sizes = [1, 128], strides = [1, 1]} : vector<3x128xf32> to vector<1x128xf32>
    %2 = vector.extract_strided_slice %0 {offsets = [1, 0], sizes = [1, 128], strides = [1, 1]} : vector<3x128xf32> to vector<1x128xf32>
    %3 = vector.extract_strided_slice %0 {offsets = [2, 0], sizes = [1, 128], strides = [1, 1]} : vector<3x128xf32> to vector<1x128xf32>
    %c0_1 = arith.constant 0 : index
    %4 = memref.load %arg1[%c0_1] : memref<26xf32, #tpu.memory_space<smem>>
    %5 = vector.broadcast %4 : f32 to vector<1x128xf32>
    %6 = arith.mulf %5, %1 : vector<1x128xf32>
    %c1 = arith.constant 1 : index
    %7 = memref.load %arg1[%c1] : memref<26xf32, #tpu.memory_space<smem>>
    %8 = vector.broadcast %7 : f32 to vector<1x128xf32>
    %9 = arith.mulf %8, %2 : vector<1x128xf32>
    %10 = arith.addf %6, %9 : vector<1x128xf32>
    %c2 = arith.constant 2 : index
    %11 = memref.load %arg1[%c2] : memref<26xf32, #tpu.memory_space<smem>>
    %12 = vector.broadcast %11 : f32 to vector<1x128xf32>
    %13 = arith.mulf %12, %3 : vector<1x128xf32>
    %14 = arith.addf %10, %13 : vector<1x128xf32>
    %c9 = arith.constant 9 : index
    %15 = memref.load %arg1[%c9] : memref<26xf32, #tpu.memory_space<smem>>
    %16 = vector.broadcast %15 : f32 to vector<1x128xf32>
    %17 = arith.addf %14, %16 : vector<1x128xf32>
    %cst = arith.constant 0.000000e+00 : f32
    %18 = vector.broadcast %cst : f32 to vector<1x128xf32>
    %19 = arith.subf %18, %17 : vector<1x128xf32>
    %20 = math.exp %19 : vector<1x128xf32>
    %cst_2 = arith.constant 1.000000e+00 : f32
    %21 = vector.broadcast %cst_2 : f32 to vector<1x128xf32>
    %22 = arith.addf %21, %20 : vector<1x128xf32>
    %23 = tpu.reciprocal %22 {approx = true} : vector<1x128xf32> -> vector<1x128xf32>
    %c3 = arith.constant 3 : index
    %24 = memref.load %arg1[%c3] : memref<26xf32, #tpu.memory_space<smem>>
    %25 = vector.broadcast %24 : f32 to vector<1x128xf32>
    %26 = arith.mulf %25, %1 : vector<1x128xf32>
    %c4 = arith.constant 4 : index
    %27 = memref.load %arg1[%c4] : memref<26xf32, #tpu.memory_space<smem>>
    %28 = vector.broadcast %27 : f32 to vector<1x128xf32>
    %29 = arith.mulf %28, %2 : vector<1x128xf32>
    %30 = arith.addf %26, %29 : vector<1x128xf32>
    %c5 = arith.constant 5 : index
    %31 = memref.load %arg1[%c5] : memref<26xf32, #tpu.memory_space<smem>>
    %32 = vector.broadcast %31 : f32 to vector<1x128xf32>
    %33 = arith.mulf %32, %3 : vector<1x128xf32>
    %34 = arith.addf %30, %33 : vector<1x128xf32>
    %c10 = arith.constant 10 : index
    %35 = memref.load %arg1[%c10] : memref<26xf32, #tpu.memory_space<smem>>
    %36 = vector.broadcast %35 : f32 to vector<1x128xf32>
    %37 = arith.addf %34, %36 : vector<1x128xf32>
    %cst_3 = arith.constant 0.000000e+00 : f32
    %38 = vector.broadcast %cst_3 : f32 to vector<1x128xf32>
    %39 = arith.subf %38, %37 : vector<1x128xf32>
    %40 = math.exp %39 : vector<1x128xf32>
    %cst_4 = arith.constant 1.000000e+00 : f32
    %41 = vector.broadcast %cst_4 : f32 to vector<1x128xf32>
    %42 = arith.addf %41, %40 : vector<1x128xf32>
    %43 = tpu.reciprocal %42 {approx = true} : vector<1x128xf32> -> vector<1x128xf32>
    %c6 = arith.constant 6 : index
    %44 = memref.load %arg1[%c6] : memref<26xf32, #tpu.memory_space<smem>>
    %45 = vector.broadcast %44 : f32 to vector<1x128xf32>
    %46 = arith.mulf %45, %1 : vector<1x128xf32>
    %c7 = arith.constant 7 : index
    %47 = memref.load %arg1[%c7] : memref<26xf32, #tpu.memory_space<smem>>
    %48 = vector.broadcast %47 : f32 to vector<1x128xf32>
    %49 = arith.mulf %48, %2 : vector<1x128xf32>
    %50 = arith.addf %46, %49 : vector<1x128xf32>
    %c8 = arith.constant 8 : index
    %51 = memref.load %arg1[%c8] : memref<26xf32, #tpu.memory_space<smem>>
    %52 = vector.broadcast %51 : f32 to vector<1x128xf32>
    %53 = arith.mulf %52, %3 : vector<1x128xf32>
    %54 = arith.addf %50, %53 : vector<1x128xf32>
    %c11 = arith.constant 11 : index
    %55 = memref.load %arg1[%c11] : memref<26xf32, #tpu.memory_space<smem>>
    %56 = vector.broadcast %55 : f32 to vector<1x128xf32>
    %57 = arith.addf %54, %56 : vector<1x128xf32>
    %cst_5 = arith.constant 0.000000e+00 : f32
    %58 = vector.broadcast %cst_5 : f32 to vector<1x128xf32>
    %59 = arith.subf %58, %57 : vector<1x128xf32>
    %60 = math.exp %59 : vector<1x128xf32>
    %cst_6 = arith.constant 1.000000e+00 : f32
    %61 = vector.broadcast %cst_6 : f32 to vector<1x128xf32>
    %62 = arith.addf %61, %60 : vector<1x128xf32>
    %63 = tpu.reciprocal %62 {approx = true} : vector<1x128xf32> -> vector<1x128xf32>
    %c12 = arith.constant 12 : index
    %64 = memref.load %arg1[%c12] : memref<26xf32, #tpu.memory_space<smem>>
    %65 = vector.broadcast %64 : f32 to vector<1x128xf32>
    %66 = arith.mulf %65, %23 : vector<1x128xf32>
    %c13 = arith.constant 13 : index
    %67 = memref.load %arg1[%c13] : memref<26xf32, #tpu.memory_space<smem>>
    %68 = vector.broadcast %67 : f32 to vector<1x128xf32>
    %69 = arith.mulf %68, %43 : vector<1x128xf32>
    %70 = arith.addf %66, %69 : vector<1x128xf32>
    %c14 = arith.constant 14 : index
    %71 = memref.load %arg1[%c14] : memref<26xf32, #tpu.memory_space<smem>>
    %72 = vector.broadcast %71 : f32 to vector<1x128xf32>
    %73 = arith.mulf %72, %63 : vector<1x128xf32>
    %74 = arith.addf %70, %73 : vector<1x128xf32>
    %c18 = arith.constant 18 : index
    %75 = memref.load %arg1[%c18] : memref<26xf32, #tpu.memory_space<smem>>
    %76 = vector.broadcast %75 : f32 to vector<1x128xf32>
    %77 = arith.addf %74, %76 : vector<1x128xf32>
    %cst_7 = arith.constant 0.000000e+00 : f32
    %78 = vector.broadcast %cst_7 : f32 to vector<1x128xf32>
    %79 = arith.maximumf %77, %78 : vector<1x128xf32>
    %c15 = arith.constant 15 : index
    %80 = memref.load %arg1[%c15] : memref<26xf32, #tpu.memory_space<smem>>
    %81 = vector.broadcast %80 : f32 to vector<1x128xf32>
    %82 = arith.mulf %81, %23 : vector<1x128xf32>
    %c16 = arith.constant 16 : index
    %83 = memref.load %arg1[%c16] : memref<26xf32, #tpu.memory_space<smem>>
    %84 = vector.broadcast %83 : f32 to vector<1x128xf32>
    %85 = arith.mulf %84, %43 : vector<1x128xf32>
    %86 = arith.addf %82, %85 : vector<1x128xf32>
    %c17 = arith.constant 17 : index
    %87 = memref.load %arg1[%c17] : memref<26xf32, #tpu.memory_space<smem>>
    %88 = vector.broadcast %87 : f32 to vector<1x128xf32>
    %89 = arith.mulf %88, %63 : vector<1x128xf32>
    %90 = arith.addf %86, %89 : vector<1x128xf32>
    %c19 = arith.constant 19 : index
    %91 = memref.load %arg1[%c19] : memref<26xf32, #tpu.memory_space<smem>>
    %92 = vector.broadcast %91 : f32 to vector<1x128xf32>
    %93 = arith.addf %90, %92 : vector<1x128xf32>
    %cst_8 = arith.constant 0.000000e+00 : f32
    %94 = vector.broadcast %cst_8 : f32 to vector<1x128xf32>
    %95 = arith.maximumf %93, %94 : vector<1x128xf32>
    %c20 = arith.constant 20 : index
    %96 = memref.load %arg1[%c20] : memref<26xf32, #tpu.memory_space<smem>>
    %97 = vector.broadcast %96 : f32 to vector<1x128xf32>
    %98 = arith.mulf %97, %79 : vector<1x128xf32>
    %c21 = arith.constant 21 : index
    %99 = memref.load %arg1[%c21] : memref<26xf32, #tpu.memory_space<smem>>
    %100 = vector.broadcast %99 : f32 to vector<1x128xf32>
    %101 = arith.mulf %100, %95 : vector<1x128xf32>
    %102 = arith.addf %98, %101 : vector<1x128xf32>
    %c24 = arith.constant 24 : index
    %103 = memref.load %arg1[%c24] : memref<26xf32, #tpu.memory_space<smem>>
    %104 = vector.broadcast %103 : f32 to vector<1x128xf32>
    %105 = arith.addf %102, %104 : vector<1x128xf32>
    %c22 = arith.constant 22 : index
    %106 = memref.load %arg1[%c22] : memref<26xf32, #tpu.memory_space<smem>>
    %107 = vector.broadcast %106 : f32 to vector<1x128xf32>
    %108 = arith.mulf %107, %79 : vector<1x128xf32>
    %c23 = arith.constant 23 : index
    %109 = memref.load %arg1[%c23] : memref<26xf32, #tpu.memory_space<smem>>
    %110 = vector.broadcast %109 : f32 to vector<1x128xf32>
    %111 = arith.mulf %110, %95 : vector<1x128xf32>
    %112 = arith.addf %108, %111 : vector<1x128xf32>
    %c25 = arith.constant 25 : index
    %113 = memref.load %arg1[%c25] : memref<26xf32, #tpu.memory_space<smem>>
    %114 = vector.broadcast %113 : f32 to vector<1x128xf32>
    %115 = arith.addf %112, %114 : vector<1x128xf32>
    %116 = arith.subf %105, %115 : vector<1x128xf32>
    %cst_9 = arith.constant 0.000000e+00 : f32
    %117 = vector.broadcast %cst_9 : f32 to vector<1x128xf32>
    %118 = arith.subf %117, %116 : vector<1x128xf32>
    %119 = math.exp %118 : vector<1x128xf32>
    %cst_10 = arith.constant 1.000000e+00 : f32
    %120 = vector.broadcast %cst_10 : f32 to vector<1x128xf32>
    %121 = arith.addf %120, %119 : vector<1x128xf32>
    %122 = tpu.reciprocal %121 {approx = true} : vector<1x128xf32> -> vector<1x128xf32>
    %c0_11 = arith.constant 0 : index
    %c0_12 = arith.constant 0 : index
    %123 = vector.load %arg3[%c0_11, %c0_12] : memref<2x128xf32, #tpu.memory_space<vmem>>, vector<1x128xf32>
    tpu.vector_store %arg3[%c0_11, %c0_12], %122 {strides = array<i32>} : memref<2x128xf32, #tpu.memory_space<vmem>>, vector<1x128xf32>,
    %cst_13 = arith.constant 1.000000e+00 : f32
    %124 = vector.broadcast %cst_13 : f32 to vector<1x128xf32>
    %125 = arith.subf %124, %122 : vector<1x128xf32>
    %c1_14 = arith.constant 1 : index
    %c0_15 = arith.constant 0 : index
    %126 = vector.load %arg3[%c1_14, %c0_15] : memref<2x128xf32, #tpu.memory_space<vmem>>, vector<1x128xf32>
    tpu.vector_store %arg3[%c1_14, %c0_15], %125 {strides = array<i32>} : memref<2x128xf32, #tpu.memory_space<vmem>>, vector<1x128xf32>,
    return
  }
  func.func @transform_0(%arg0: i32) -> i32 {
    %c0_i32 = arith.constant 0 : i32
    %c0_i32_0 = arith.constant 0 : i32
    return %c0_i32 : i32
  }
  func.func @transform_1(%arg0: i32) -> (i32, i32) {
    %c0_i32 = arith.constant 0 : i32
    %c0_i32_0 = arith.constant 0 : i32
    return %c0_i32, %arg0 : i32, i32
  }
  func.func @transform_2(%arg0: i32) -> (i32, i32) {
    %c0_i32 = arith.constant 0 : i32
    %c0_i32_0 = arith.constant 0 : i32
    return %c0_i32, %arg0 : i32, i32
  }
}

</mosaic_0001>

<llo_original>
// kernel: tpu_custom_call.1
$region0: #{tpu_custom_call.1}
  #allocation0 [shape = 'u32[]', space=smem, size = 0x4, offset = 0x4, fixed_abs, tag = 'smem constant byte address 0x4 - core index']
  #allocation1 [shape = 'u32[144,128]{1,0:T(1,128)}', space=vmem, size = 0x12000, scoped, tag = 'internal scratch']
  %s0 = inlined_call_operand.hbm [shape: f32[26], index: 0, kind: input, shape index: {}]
  %s1 = inlined_call_operand.hbm [shape: f32[3,128], index: 1, kind: input, shape index: {}]
  %s2 = inlined_call_operand.hbm [shape: f32[2,128], index: 2, kind: output, shape index: {}]
  %s3 = sld [smem:[#allocation0]]
  $region26: #{tpu_custom_call.1} parent=0
    _
  %s5 = ssub.s32 1, %s3
  %s6 = scalar_select 0, %s5, %s3
  $region1: #{tpu_custom_call.1} parent=0
    #allocation2 [shape = 'u8[512]{0}', space=smem, size = 0x200, scoped, tag = 'input window, operand 0, single buffered']
    #allocation3 [shape = 's32[1]{0}', space=sflag, size = 0x4, scoped, tag = 'scoped memory for tpu_custom_call.1']
    #allocation4 [shape = 's32[1]{0}', space=sflag, size = 0x4, scoped, tag = 'scoped memory for tpu_custom_call.1']
    #allocation5 [shape = 's32[1]{0}', space=sflag, size = 0x4, scoped, tag = 'scoped memory for tpu_custom_call.1']
    #allocation6 [shape = 'u8[2048]{0}', space=vmem, size = 0x800, scoped, tag = 'input window, operand 1, single buffered']
    #allocation7 [shape = 'u8[1024]{0}', space=vmem, size = 0x400, scoped, tag = 'output window, operand 0, single buffered']
    %7 = vsyncpa [#allocation5], 0
    %8 = vsyncpa [#allocation3], 0
    %9 = vsyncpa [#allocation4], 0
    // Predicated region
    $region2: #{tpu_custom_call.1} parent=1 // pred_check
      _
    $region3: #{tpu_custom_call.1} parent=1 // pred_check_branch
      %11 = sbr.rel (0) target = $region5
    $region4: #{tpu_custom_call.1} parent=1 // pred_region
      %s13 = ssub.s32 16, 16
      %14 = vsyncadd [#allocation5], %s13
      %17 = dma.hbm_to_smem %s0, 16, [#allocation2], [#allocation5]
    $region5: #{tpu_custom_call.1} parent=1 // pred_fallthru
      _
    // Predicated region
    $region6: #{tpu_custom_call.1} parent=1 // pred_check
      _
    $region7: #{tpu_custom_call.1} parent=1 // pred_check_branch
      %19 = sbr.rel (0) target = $region9
    $region8: #{tpu_custom_call.1} parent=1 // pred_region
      %s21 = ssub.s32 64, 64
      %22 = vsyncadd [#allocation3], %s21
      %s24 = sshll.u32 [#allocation6], 4
      %s25 = int_to_ptr.vmem [resolvable:$true] %s24
      %27 = dma.hbm_to_vmem [thread:$0]  %s1, 64, %s25, [#allocation3]
    $region9: #{tpu_custom_call.1} parent=1 // pred_fallthru
      _
    // Predicated region
    $region10: #{tpu_custom_call.1} parent=1 // pred_check
      _
    $region11: #{tpu_custom_call.1} parent=1 // pred_check_branch
      %29 = sbr.rel (0) target = $region13
    $region12: #{tpu_custom_call.1} parent=1 // pred_region
      %30 = dma.done [#allocation5], 16
    $region13: #{tpu_custom_call.1} parent=1 // pred_fallthru
      _
    // Predicated region
    $region14: #{tpu_custom_call.1} parent=1 // pred_check
      _
    $region15: #{tpu_custom_call.1} parent=1 // pred_check_branch
      %32 = sbr.rel (0) target = $region17
    $region16: #{tpu_custom_call.1} parent=1 // pred_region
      %33 = dma.done [#allocation3], 64
    $region17: #{tpu_custom_call.1} parent=1 // pred_fallthru
      _
    %34 = sfence
    %v35 = vld [vmem:[#allocation6] sm:$0x7]
    %s36 = sld [smem:[#allocation2]]
    %v37 = vstv %s36
    %v38 = vmul.f32 %v37, %v35
    %s39 = sld [smem:[#allocation2 + $0x1]]
    %v40 = vstv %s39
    %v41 = vmul.f32 %v40, %v35
    %v43 = vrot.slane %v41, 1
    %v45 = vadd.f32 %v38, %v43
    %s46 = sld [smem:[#allocation2 + $0x2]]
    %v47 = vstv %s46
    %v48 = vmul.f32 %v47, %v35
    %v50 = vrot.slane %v48, 2
    %v52 = vadd.f32 %v45, %v50
    %s53 = sld [smem:[#allocation2 + $0x9]]
    %v54 = vstv %s53
    %v55 = vadd.f32 %v52, %v54
    %v56 = vsub.f32 0.0, %v55
    %v57 = vmul.f32 %v56, 1.442695
    %v58 = vpow.pop %v57
    %v59 = vadd.f32 %v58, 1.0
    %v60 = vrcp.pop %v59
    %s61 = sld [smem:[#allocation2 + $0x3]]
    %v62 = vstv %s61
    %v63 = vmul.f32 %v62, %v35
    %s64 = sld [smem:[#allocation2 + $0x4]]
    %v65 = vstv %s64
    %v66 = vmul.f32 %v65, %v35
    %v68 = vrot.slane %v66, 1
    %v70 = vadd.f32 %v63, %v68
    %s71 = sld [smem:[#allocation2 + $0x5]]
    %v72 = vstv %s71
    %v73 = vmul.f32 %v72, %v35
    %v75 = vrot.slane %v73, 2
    %v77 = vadd.f32 %v70, %v75
    %s78 = sld [smem:[#allocation2 + $0xa]]
    %v79 = vstv %s78
    %v80 = vadd.f32 %v77, %v79
    %v81 = vsub.f32 0.0, %v80
    %v82 = vmul.f32 %v81, 1.442695
    %v83 = vpow.pop %v82
    %v84 = vadd.f32 %v83, 1.0
    %v85 = vrcp.pop %v84
    %s86 = sld [smem:[#allocation2 + $0x6]]
    %v87 = vstv %s86
    %v88 = vmul.f32 %v87, %v35
    %s89 = sld [smem:[#allocation2 + $0x7]]
    %v90 = vstv %s89
    %v91 = vmul.f32 %v90, %v35
    %v93 = vrot.slane %v91, 1
    %v95 = vadd.f32 %v88, %v93
    %s96 = sld [smem:[#allocation2 + $0x8]]
    %v97 = vstv %s96
    %v98 = vmul.f32 %v97, %v35
    %v100 = vrot.slane %v98, 2
    %v102 = vadd.f32 %v95, %v100
    %s103 = sld [smem:[#allocation2 + $0xb]]
    %v104 = vstv %s103
    %v105 = vadd.f32 %v102, %v104
    %v106 = vsub.f32 0.0, %v105
    %v107 = vmul.f32 %v106, 1.442695
    %v108 = vpow.pop %v107
    %v109 = vadd.f32 %v108, 1.0
    %v110 = vrcp.pop %v109
    %s111 = sld [smem:[#allocation2 + $0xc]]
    %v112 = vstv %s111
    %v113 = vmul.f32 %v112, %v60
    %s114 = sld [smem:[#allocation2 + $0xd]]
    %v115 = vstv %s114
    %v116 = vmul.f32 %v115, %v85
    %v117 = vadd.f32 %v113, %v116
    %s118 = sld [smem:[#allocation2 + $0xe]]
    %v119 = vstv %s118
    %v120 = vmul.f32 %v119, %v110
    %v121 = vadd.f32 %v117, %v120
    %s122 = sld [smem:[#allocation2 + $0x12]]
    %v123 = vstv %s122
    %v124 = vadd.f32 %v121, %v123
    %v125 = vmax.f32 %v124, 0.0
    %s126 = sld [smem:[#allocation2 + $0xf]]
    %v127 = vstv %s126
    %v128 = vmul.f32 %v127, %v60
    %s129 = sld [smem:[#allocation2 + $0x10]]
    %v130 = vstv %s129
    %v131 = vmul.f32 %v130, %v85
    %v132 = vadd.f32 %v128, %v131
    %s133 = sld [smem:[#allocation2 + $0x11]]
    %v134 = vstv %s133
    %v135 = vmul.f32 %v134, %v110
    %v136 = vadd.f32 %v132, %v135
    %s137 = sld [smem:[#allocation2 + $0x13]]
    %v138 = vstv %s137
    %v139 = vadd.f32 %v136, %v138
    %v140 = vmax.f32 %v139, 0.0
    %s141 = sld [smem:[#allocation2 + $0x14]]
    %v142 = vstv %s141
    %v143 = vmul.f32 %v142, %v125
    %s144 = sld [smem:[#allocation2 + $0x15]]
    %v145 = vstv %s144
    %v146 = vmul.f32 %v145, %v140
    %v147 = vadd.f32 %v143, %v146
    %s148 = sld [smem:[#allocation2 + $0x18]]
    %v149 = vstv %s148
    %v150 = vadd.f32 %v147, %v149
    %s151 = sld [smem:[#allocation2 + $0x16]]
    %v152 = vstv %s151
    %v153 = vmul.f32 %v152, %v125
    %s154 = sld [smem:[#allocation2 + $0x17]]
    %v155 = vstv %s154
    %v156 = vmul.f32 %v155, %v140
    %v157 = vadd.f32 %v153, %v156
    %s158 = sld [smem:[#allocation2 + $0x19]]
    %v159 = vstv %s158
    %v160 = vadd.f32 %v157, %v159
    %v161 = vsub.f32 %v150, %v160
    %v162 = vsub.f32 0.0, %v161
    %v163 = vmul.f32 %v162, 1.442695
    %v164 = vpow.pop %v163
    %v165 = vadd.f32 %v164, 1.0
    %v166 = vrcp.pop %v165
    %167 = vst [vmem:[#allocation7] sm:$0x1] %v166
    %v168 = vsub.f32 1.0, %v166
    %169 = vst [vmem:[#allocation7 + $0x1] sm:$0x1] %v168
    // Predicated region
    $region18: #{tpu_custom_call.1} parent=1 // pred_check
      _
    $region19: #{tpu_custom_call.1} parent=1 // pred_check_branch
      %171 = sbr.rel (0) target = $region21
    $region20: #{tpu_custom_call.1} parent=1 // pred_region
      %s173 = ssub.s32 32, 32
      %174 = vsyncadd [#allocation4], %s173
      %s176 = sshll.u32 [#allocation7], 4
      %s177 = int_to_ptr.vmem [resolvable:$true] %s176
      %179 = dma.vmem_to_hbm [thread:$0]  %s177, 32, %s2, [#allocation4]
    $region21: #{tpu_custom_call.1} parent=1 // pred_fallthru
      _
    // Predicated region
    $region22: #{tpu_custom_call.1} parent=1 // pred_check
      _
    $region23: #{tpu_custom_call.1} parent=1 // pred_check_branch
      %181 = sbr.rel (0) target = $region25
    $region24: #{tpu_custom_call.1} parent=1 // pred_region
      %182 = dma.done [#allocation4], 32
    $region25: #{tpu_custom_call.1} parent=1 // pred_fallthru
      _
    %183 = vsyncpa [#allocation3], 1
    %184 = vsyncpa [#allocation4], 1
    %185 = vsyncpa [#allocation5], 1

</llo_original>
